<compile_context>
chip_gen: v6e
topology: v6e:2x2x1
jax: 0.10.0
libtpu: 0.0.40
codegen_flags: <defaults>
</compile_context>

<pallas_src>
import functools

import jax
import jax.numpy as jnp
import numpy as np
from jax.experimental import pallas as pl
from jax.experimental.pallas import tpu as pltpu


def _round_up(x, m):
    return (x + m - 1) // m * m


def _conv3x3_kernel(x_ref, w_ref, b_ref, mask_ref, o_ref, *, cin, coutp, w, m):
    """In-kernel im2col 3x3 'same' conv for one batch element.

    x_ref:    (cin, (H+2)*W + 2)  bf16  flattened, H-halo-padded activations
    w_ref:    (coutp, 9*cin)      bf16  taps in (dy, dx, ci) order
    b_ref:    (coutp, 1)          f32
    mask_ref: (2, m)              f32   row0: (x != 0), row1: (x != W-1)
    o_ref:    (coutp, m)          bf16  m = H*W, spatial positions on lanes
    """
    acc = jnp.zeros((coutp, m), jnp.float32)
    for dy in range(3):
        for dx in range(3):
            t = dy * 3 + dx
            start = dy * w + dx                        # static lane offset
            tap = x_ref[:, start:start + m]            # (cin, m) bf16
            w_tap = w_ref[:, t * cin:(t + 1) * cin]    # (coutp, cin) bf16
            contrib = jnp.dot(w_tap, tap, preferred_element_type=jnp.float32)
            # Taps that would read across a row boundary get their
            # contribution zeroed at the affected output column, which
            # reproduces the conv's W-axis zero padding exactly.
            if dx == 0:
                contrib = contrib * mask_ref[0:1, :]
            elif dx == 2:
                contrib = contrib * mask_ref[1:2, :]
            acc = acc + contrib
    o_ref[...] = (acc + b_ref[...]).astype(o_ref.dtype)


def conv3x3_same(x_nchw, w_hwio, bias):
    """Conv2d(Cin, Cout, 3, padding=1, stride=1): NCHW in -> NCHW f32 out."""
    bs, cin, h, w = x_nchw.shape
    cout = w_hwio.shape[-1]
    coutp = _round_up(cout, 8)           # sublane granule only; no 128-lane pad
    m = h * w                            # output spatial positions per image
    p = (h + 2) * w + 2                  # flat length incl. H halo + guards

    # Activations: bf16 FIRST (halves wrapper HBM traffic), then only the
    # H-axis halo pad, flatten spatial, and 2 guard zeros for the corner taps.
    xb = x_nchw.astype(jnp.bfloat16)
    xb = jnp.pad(xb, ((0, 0), (0, 0), (1, 1), (0, 0)))         # (B, Cin, H+2, W)
    xf = jnp.pad(xb.reshape(bs, cin, (h + 2) * w),
                 ((0, 0), (0, 0), (1, 1)))                     # (B, Cin, P)

    # Weights: (3,3,Cin,Cout) HWIO -> (Coutp, 9*Cin), tap-major (dy, dx, ci).
    wt = jnp.transpose(w_hwio, (3, 0, 1, 2)).reshape(cout, 9 * cin)
    wt = jnp.pad(wt, ((0, coutp - cout), (0, 0))).astype(jnp.bfloat16)

    bp = jnp.pad(bias, (0, coutp - cout)).astype(jnp.float32).reshape(coutp, 1)

    # {0,1} validity masks for the dx=0 / dx=2 taps (host-side constants).
    col = np.arange(m, dtype=np.int64) % w
    masks = jnp.asarray(np.stack([col != 0, col != (w - 1)]).astype(np.float32))

    flops = 2 * bs * m * 9 * cin * coutp
    bytes_accessed = (xf.size * 2 + wt.size * 2 + bp.size * 4 +
                      masks.size * 4 + bs * coutp * m * 2)

    out = pl.pallas_call(
        functools.partial(_conv3x3_kernel, cin=cin, coutp=coutp, w=w, m=m),
        out_shape=jax.ShapeDtypeStruct((bs, coutp, m), jnp.bfloat16),
        grid_spec=pltpu.PrefetchScalarGridSpec(
            num_scalar_prefetch=0,
            grid=(bs,),
            in_specs=[
                pl.BlockSpec((None, cin, p), lambda b: (b, 0, 0)),
                pl.BlockSpec((coutp, 9 * cin), lambda b: (0, 0)),
                pl.BlockSpec((coutp, 1), lambda b: (0, 0)),
                pl.BlockSpec((2, m), lambda b: (0, 0)),
            ],
            out_specs=pl.BlockSpec((None, coutp, m), lambda b: (b, 0, 0)),
        ),
        compiler_params=pltpu.CompilerParams(
            dimension_semantics=("parallel",)),
        cost_estimate=pl.CostEstimate(
            flops=flops, transcendentals=0, bytes_accessed=bytes_accessed),
    )(xf, wt, bp, masks)

    # (B, Coutp, H*W) bf16 -> NCHW f32: slice + free reshape + cast in one
    # fused consumer pass; no transpose needed since the kernel already emits
    # channels-first.
    return out[:, :cout, :].reshape(bs, cout, h, w).astype(jnp.float32)


def noop_sub_forward(x_nchw, w_hwio, bias):
    """NoopSub.forward: just run the wrapped sub-module (here, the conv)."""
    return conv3x3_same(x_nchw, w_hwio, bias)


def _reference(x_nchw, w_hwio, bias):
    """Pure-JAX f32 reference mirroring sub = Conv2d(Cin, Cout, 3, padding=1)."""
    w_oihw = jnp.transpose(w_hwio, (3, 2, 0, 1))
    y = jax.lax.conv_general_dilated(
        x_nchw, w_oihw, window_strides=(1, 1), padding=((1, 1), (1, 1)),
        dimension_numbers=("NCHW", "OIHW", "NCHW"))
    return y + bias[None, :, None, None]


if __name__ == "__main__":
    key = jax.random.PRNGKey(0)
    k_x, k_w, k_b = jax.random.split(key, 3)

    bs, cin, h, w = 2, 4, 16, 16
    cout = 8

    x = jax.random.normal(k_x, (bs, cin, h, w), dtype=jnp.float32)
    # Deterministic synthetic Conv2d(cin, cout, 3, padding=1) params (HWIO).
    w_hwio = 0.1 * jax.random.normal(k_w, (3, 3, cin, cout), dtype=jnp.float32)
    bias = 0.1 * jax.random.normal(k_b, (cout,), dtype=jnp.float32)

    out = noop_sub_forward(x, w_hwio, bias)
    out = jax.block_until_ready(out)

    ref = _reference(x, w_hwio, bias)
    assert out.shape == (bs, cout, h, w), out.shape
    # bf16 MXU inputs + bf16 output with f32 accumulation -> loosened tolerance.
    assert jnp.allclose(out, ref, atol=3e-2, rtol=3e-2), \
        float(jnp.max(jnp.abs(out - ref)))

    print("KERNEL_OK")
</pallas_src>

<mosaic_0001>
module attributes {stable_mosaic.version = 11 : i64} {
  func.func @_conv3x3_kernel(%arg0: i32, %arg1: memref<1x4x290xbf16, #tpu.memory_space<vmem>>, %arg2: memref<8x36xbf16, #tpu.memory_space<vmem>>, %arg3: memref<8x1xf32, #tpu.memory_space<vmem>>, %arg4: memref<2x256xf32, #tpu.memory_space<vmem>>, %arg5: memref<1x8x256xbf16, #tpu.memory_space<vmem>>) attributes {dimension_semantics = [#tpu.dimension_semantics<parallel>], iteration_bounds = array<i64: 2>, scalar_prefetch = 0 : i64, scratch_operands = 0 : i64, tpu.core_type = #tpu.core_type<tc>, window_params = [{transform_indices = @transform_0, window_bounds = array<i64: 1, 4, 290>}, {pipeline_mode = #tpu.pipeline_mode<synchronous>, transform_indices = @transform_1, window_bounds = array<i64: 8, 36>}, {pipeline_mode = #tpu.pipeline_mode<synchronous>, transform_indices = @transform_2, window_bounds = array<i64: 8, 1>}, {pipeline_mode = #tpu.pipeline_mode<synchronous>, transform_indices = @transform_3, window_bounds = array<i64: 2, 256>}, {transform_indices = @transform_4, window_bounds = array<i64: 1, 8, 256>}]} {
    %cst = arith.constant 0.000000e+00 : f32
    %0 = vector.broadcast %cst : f32 to vector<8x256xf32>
    %c0 = arith.constant 0 : index
    %c0_0 = arith.constant 0 : index
    %c0_1 = arith.constant 0 : index
    %1 = vector.load %arg1[%c0, %c0_0, %c0_1] : memref<1x4x290xbf16, #tpu.memory_space<vmem>>, vector<1x4x256xbf16>
    %2 = vector.shape_cast %1 : vector<1x4x256xbf16> to vector<4x256xbf16>
    %c0_2 = arith.constant 0 : index
    %c0_3 = arith.constant 0 : index
    %3 = vector.load %arg2[%c0_2, %c0_3] : memref<8x36xbf16, #tpu.memory_space<vmem>>, vector<8x4xbf16>
    %cst_4 = arith.constant dense<0.000000e+00> : vector<8x256xf32>
    %4 = tpu.matmul %3, %2, %cst_4 {dimension_numbers = #tpu.dot_dimension_numbers<[1], [0], [0], [1], [0, 0, 1, 1], [], []>} : vector<8x4xbf16>, vector<4x256xbf16>, vector<8x256xf32> -> vector<8x256xf32>
    %c0_5 = arith.constant 0 : index
    %c0_6 = arith.constant 0 : index
    %5 = vector.load %arg4[%c0_5, %c0_6] : memref<2x256xf32, #tpu.memory_space<vmem>>, vector<1x256xf32>
    %6 = vector.broadcast %5 : vector<1x256xf32> to vector<8x256xf32>
    %7 = arith.mulf %4, %6 : vector<8x256xf32>
    %8 = arith.addf %0, %7 : vector<8x256xf32>
    %c0_7 = arith.constant 0 : index
    %c0_8 = arith.constant 0 : index
    %c1 = arith.constant 1 : index
    %9 = vector.load %arg1[%c0_7, %c0_8, %c1] : memref<1x4x290xbf16, #tpu.memory_space<vmem>>, vector<1x4x256xbf16>
    %10 = vector.shape_cast %9 : vector<1x4x256xbf16> to vector<4x256xbf16>
    %c0_9 = arith.constant 0 : index
    %c4 = arith.constant 4 : index
    %11 = vector.load %arg2[%c0_9, %c4] : memref<8x36xbf16, #tpu.memory_space<vmem>>, vector<8x4xbf16>
    %cst_10 = arith.constant dense<0.000000e+00> : vector<8x256xf32>
    %12 = tpu.matmul %11, %10, %cst_10 {dimension_numbers = #tpu.dot_dimension_numbers<[1], [0], [0], [1], [0, 0, 1, 1], [], []>} : vector<8x4xbf16>, vector<4x256xbf16>, vector<8x256xf32> -> vector<8x256xf32>
    %13 = arith.addf %8, %12 : vector<8x256xf32>
    %c0_11 = arith.constant 0 : index
    %c0_12 = arith.constant 0 : index
    %c2 = arith.constant 2 : index
    %14 = vector.load %arg1[%c0_11, %c0_12, %c2] : memref<1x4x290xbf16, #tpu.memory_space<vmem>>, vector<1x4x256xbf16>
    %15 = vector.shape_cast %14 : vector<1x4x256xbf16> to vector<4x256xbf16>
    %c0_13 = arith.constant 0 : index
    %c8 = arith.constant 8 : index
    %16 = vector.load %arg2[%c0_13, %c8] : memref<8x36xbf16, #tpu.memory_space<vmem>>, vector<8x4xbf16>
    %cst_14 = arith.constant dense<0.000000e+00> : vector<8x256xf32>
    %17 = tpu.matmul %16, %15, %cst_14 {dimension_numbers = #tpu.dot_dimension_numbers<[1], [0], [0], [1], [0, 0, 1, 1], [], []>} : vector<8x4xbf16>, vector<4x256xbf16>, vector<8x256xf32> -> vector<8x256xf32>
    %c1_15 = arith.constant 1 : index
    %c0_16 = arith.constant 0 : index
    %18 = vector.load %arg4[%c1_15, %c0_16] : memref<2x256xf32, #tpu.memory_space<vmem>>, vector<1x256xf32>
    %19 = vector.broadcast %18 : vector<1x256xf32> to vector<8x256xf32>
    %20 = arith.mulf %17, %19 : vector<8x256xf32>
    %21 = arith.addf %13, %20 : vector<8x256xf32>
    %c0_17 = arith.constant 0 : index
    %c0_18 = arith.constant 0 : index
    %c16 = arith.constant 16 : index
    %22 = vector.load %arg1[%c0_17, %c0_18, %c16] : memref<1x4x290xbf16, #tpu.memory_space<vmem>>, vector<1x4x256xbf16>
    %23 = vector.shape_cast %22 : vector<1x4x256xbf16> to vector<4x256xbf16>
    %c0_19 = arith.constant 0 : index
    %c12 = arith.constant 12 : index
    %24 = vector.load %arg2[%c0_19, %c12] : memref<8x36xbf16, #tpu.memory_space<vmem>>, vector<8x4xbf16>
    %cst_20 = arith.constant dense<0.000000e+00> : vector<8x256xf32>
    %25 = tpu.matmul %24, %23, %cst_20 {dimension_numbers = #tpu.dot_dimension_numbers<[1], [0], [0], [1], [0, 0, 1, 1], [], []>} : vector<8x4xbf16>, vector<4x256xbf16>, vector<8x256xf32> -> vector<8x256xf32>
    %c0_21 = arith.constant 0 : index
    %c0_22 = arith.constant 0 : index
    %26 = vector.load %arg4[%c0_21, %c0_22] : memref<2x256xf32, #tpu.memory_space<vmem>>, vector<1x256xf32>
    %27 = vector.broadcast %26 : vector<1x256xf32> to vector<8x256xf32>
    %28 = arith.mulf %25, %27 : vector<8x256xf32>
    %29 = arith.addf %21, %28 : vector<8x256xf32>
    %c0_23 = arith.constant 0 : index
    %c0_24 = arith.constant 0 : index
    %c17 = arith.constant 17 : index
    %30 = vector.load %arg1[%c0_23, %c0_24, %c17] : memref<1x4x290xbf16, #tpu.memory_space<vmem>>, vector<1x4x256xbf16>
    %31 = vector.shape_cast %30 : vector<1x4x256xbf16> to vector<4x256xbf16>
    %c0_25 = arith.constant 0 : index
    %c16_26 = arith.constant 16 : index
    %32 = vector.load %arg2[%c0_25, %c16_26] : memref<8x36xbf16, #tpu.memory_space<vmem>>, vector<8x4xbf16>
    %cst_27 = arith.constant dense<0.000000e+00> : vector<8x256xf32>
    %33 = tpu.matmul %32, %31, %cst_27 {dimension_numbers = #tpu.dot_dimension_numbers<[1], [0], [0], [1], [0, 0, 1, 1], [], []>} : vector<8x4xbf16>, vector<4x256xbf16>, vector<8x256xf32> -> vector<8x256xf32>
    %34 = arith.addf %29, %33 : vector<8x256xf32>
    %c0_28 = arith.constant 0 : index
    %c0_29 = arith.constant 0 : index
    %c18 = arith.constant 18 : index
    %35 = vector.load %arg1[%c0_28, %c0_29, %c18] : memref<1x4x290xbf16, #tpu.memory_space<vmem>>, vector<1x4x256xbf16>
    %36 = vector.shape_cast %35 : vector<1x4x256xbf16> to vector<4x256xbf16>
    %c0_30 = arith.constant 0 : index
    %c20 = arith.constant 20 : index
    %37 = vector.load %arg2[%c0_30, %c20] : memref<8x36xbf16, #tpu.memory_space<vmem>>, vector<8x4xbf16>
    %cst_31 = arith.constant dense<0.000000e+00> : vector<8x256xf32>
    %38 = tpu.matmul %37, %36, %cst_31 {dimension_numbers = #tpu.dot_dimension_numbers<[1], [0], [0], [1], [0, 0, 1, 1], [], []>} : vector<8x4xbf16>, vector<4x256xbf16>, vector<8x256xf32> -> vector<8x256xf32>
    %c1_32 = arith.constant 1 : index
    %c0_33 = arith.constant 0 : index
    %39 = vector.load %arg4[%c1_32, %c0_33] : memref<2x256xf32, #tpu.memory_space<vmem>>, vector<1x256xf32>
    %40 = vector.broadcast %39 : vector<1x256xf32> to vector<8x256xf32>
    %41 = arith.mulf %38, %40 : vector<8x256xf32>
    %42 = arith.addf %34, %41 : vector<8x256xf32>
    %c0_34 = arith.constant 0 : index
    %c0_35 = arith.constant 0 : index
    %c32 = arith.constant 32 : index
    %43 = vector.load %arg1[%c0_34, %c0_35, %c32] : memref<1x4x290xbf16, #tpu.memory_space<vmem>>, vector<1x4x256xbf16>
    %44 = vector.shape_cast %43 : vector<1x4x256xbf16> to vector<4x256xbf16>
    %c0_36 = arith.constant 0 : index
    %c24 = arith.constant 24 : index
    %45 = vector.load %arg2[%c0_36, %c24] : memref<8x36xbf16, #tpu.memory_space<vmem>>, vector<8x4xbf16>
    %cst_37 = arith.constant dense<0.000000e+00> : vector<8x256xf32>
    %46 = tpu.matmul %45, %44, %cst_37 {dimension_numbers = #tpu.dot_dimension_numbers<[1], [0], [0], [1], [0, 0, 1, 1], [], []>} : vector<8x4xbf16>, vector<4x256xbf16>, vector<8x256xf32> -> vector<8x256xf32>
    %c0_38 = arith.constant 0 : index
    %c0_39 = arith.constant 0 : index
    %47 = vector.load %arg4[%c0_38, %c0_39] : memref<2x256xf32, #tpu.memory_space<vmem>>, vector<1x256xf32>
    %48 = vector.broadcast %47 : vector<1x256xf32> to vector<8x256xf32>
    %49 = arith.mulf %46, %48 : vector<8x256xf32>
    %50 = arith.addf %42, %49 : vector<8x256xf32>
    %c0_40 = arith.constant 0 : index
    %c0_41 = arith.constant 0 : index
    %c33 = arith.constant 33 : index
    %51 = vector.load %arg1[%c0_40, %c0_41, %c33] : memref<1x4x290xbf16, #tpu.memory_space<vmem>>, vector<1x4x256xbf16>
    %52 = vector.shape_cast %51 : vector<1x4x256xbf16> to vector<4x256xbf16>
    %c0_42 = arith.constant 0 : index
    %c28 = arith.constant 28 : index
    %53 = vector.load %arg2[%c0_42, %c28] : memref<8x36xbf16, #tpu.memory_space<vmem>>, vector<8x4xbf16>
    %cst_43 = arith.constant dense<0.000000e+00> : vector<8x256xf32>
    %54 = tpu.matmul %53, %52, %cst_43 {dimension_numbers = #tpu.dot_dimension_numbers<[1], [0], [0], [1], [0, 0, 1, 1], [], []>} : vector<8x4xbf16>, vector<4x256xbf16>, vector<8x256xf32> -> vector<8x256xf32>
    %55 = arith.addf %50, %54 : vector<8x256xf32>
    %c0_44 = arith.constant 0 : index
    %c0_45 = arith.constant 0 : index
    %c34 = arith.constant 34 : index
    %56 = vector.load %arg1[%c0_44, %c0_45, %c34] : memref<1x4x290xbf16, #tpu.memory_space<vmem>>, vector<1x4x256xbf16>
    %57 = vector.shape_cast %56 : vector<1x4x256xbf16> to vector<4x256xbf16>
    %c0_46 = arith.constant 0 : index
    %c32_47 = arith.constant 32 : index
    %58 = vector.load %arg2[%c0_46, %c32_47] : memref<8x36xbf16, #tpu.memory_space<vmem>>, vector<8x4xbf16>
    %cst_48 = arith.constant dense<0.000000e+00> : vector<8x256xf32>
    %59 = tpu.matmul %58, %57, %cst_48 {dimension_numbers = #tpu.dot_dimension_numbers<[1], [0], [0], [1], [0, 0, 1, 1], [], []>} : vector<8x4xbf16>, vector<4x256xbf16>, vector<8x256xf32> -> vector<8x256xf32>
    %c1_49 = arith.constant 1 : index
    %c0_50 = arith.constant 0 : index
    %60 = vector.load %arg4[%c1_49, %c0_50] : memref<2x256xf32, #tpu.memory_space<vmem>>, vector<1x256xf32>
    %61 = vector.broadcast %60 : vector<1x256xf32> to vector<8x256xf32>
    %62 = arith.mulf %59, %61 : vector<8x256xf32>
    %63 = arith.addf %55, %62 : vector<8x256xf32>
    %c0_51 = arith.constant 0 : index
    %c0_52 = arith.constant 0 : index
    %64 = vector.load %arg3[%c0_51, %c0_52] : memref<8x1xf32, #tpu.memory_space<vmem>>, vector<8x1xf32>
    %65 = vector.broadcast %64 : vector<8x1xf32> to vector<8x256xf32>
    %66 = arith.addf %63, %65 : vector<8x256xf32>
    %67 = arith.truncf %66 : vector<8x256xf32> to vector<8x256xbf16>
    %c0_53 = arith.constant 0 : index
    %c0_54 = arith.constant 0 : index
    %c0_55 = arith.constant 0 : index
    %68 = vector.load %arg5[%c0_53, %c0_54, %c0_55] : memref<1x8x256xbf16, #tpu.memory_space<vmem>>, vector<1x8x256xbf16>
    %69 = vector.shape_cast %68 : vector<1x8x256xbf16> to vector<8x256xbf16>
    %70 = vector.shape_cast %67 : vector<8x256xbf16> to vector<1x8x256xbf16>
    tpu.vector_store %arg5[%c0_53, %c0_54, %c0_55], %70 {strides = array<i32>} : memref<1x8x256xbf16, #tpu.memory_space<vmem>>, vector<1x8x256xbf16>,
    return
  }
  func.func @transform_0(%arg0: i32) -> (i32, i32, i32) {
    %c0_i32 = arith.constant 0 : i32
    %c0_i32_0 = arith.constant 0 : i32
    %c0_i32_1 = arith.constant 0 : i32
    return %arg0, %c0_i32, %c0_i32_0 : i32, i32, i32
  }
  func.func @transform_1(%arg0: i32) -> (i32, i32) {
    %c0_i32 = arith.constant 0 : i32
    %c0_i32_0 = arith.constant 0 : i32
    %c0_i32_1 = arith.constant 0 : i32
    return %c0_i32, %c0_i32_0 : i32, i32
  }
  func.func @transform_2(%arg0: i32) -> (i32, i32) {
    %c0_i32 = arith.constant 0 : i32
    %c0_i32_0 = arith.constant 0 : i32
    %c0_i32_1 = arith.constant 0 : i32
    return %c0_i32, %c0_i32_0 : i32, i32
  }
  func.func @transform_3(%arg0: i32) -> (i32, i32) {
    %c0_i32 = arith.constant 0 : i32
    %c0_i32_0 = arith.constant 0 : i32
    %c0_i32_1 = arith.constant 0 : i32
    return %c0_i32, %c0_i32_0 : i32, i32
  }
  func.func @transform_4(%arg0: i32) -> (i32, i32, i32) {
    %c0_i32 = arith.constant 0 : i32
    %c0_i32_0 = arith.constant 0 : i32
    %c0_i32_1 = arith.constant 0 : i32
    return %arg0, %c0_i32, %c0_i32_0 : i32, i32, i32
  }
}

</mosaic_0001>

<llo_original>
// kernel: tpu_custom_call.1
$region0: #{tpu_custom_call.1}
  #allocation0 [shape = 'u32[]', space=smem, size = 0x4, offset = 0x4, fixed_abs, tag = 'smem constant byte address 0x4 - core index']
  #allocation1 [shape = 'u32[144,128]{1,0:T(1,128)}', space=vmem, size = 0x12000, scoped, tag = 'internal scratch']
  %s0 = inlined_call_operand.hbm [shape: bf16[2,4,290], index: 0, kind: input, shape index: {}]
  %s1 = inlined_call_operand.vmem [shape: bf16[8,36], index: 1, kind: input, shape index: {}]
  %s2 = inlined_call_operand.vmem [shape: f32[8,1], index: 2, kind: input, shape index: {}]
  %s3 = inlined_call_operand.vmem [shape: f32[2,256], index: 3, kind: input, shape index: {}]
  %s4 = inlined_call_operand.hbm [shape: bf16[2,8,256], index: 4, kind: output, shape index: {}]
  %s5 = sld [smem:[#allocation0]]
  $region53: #{tpu_custom_call.1} parent=0
    _
  %s7 = ssub.s32 1, %s5
  %s8 = scalar_select 0, %s7, %s5
  $region1: #{tpu_custom_call.1} parent=0
    #allocation2 [shape = 'u8[6144]{0}', space=vmem, size = 0x1800, scoped, tag = 'input window, operand 0']
    #allocation3 [shape = 's32[2]{0}', space=sflag, size = 0x8, scoped, tag = 'scoped memory for tpu_custom_call.1']
    #allocation4 [shape = 's32[2]{0}', space=sflag, size = 0x8, scoped, tag = 'scoped memory for tpu_custom_call.1']
    #allocation5 [shape = 'u8[8192]{0}', space=vmem, size = 0x2000, scoped, tag = 'output window, operand 0']
    %9 = vsyncpa [#allocation3], 0
    %s10 = scalar_lea.sflag [#allocation3], 1
    %11 = vsyncpa %s10, 0
    %12 = vsyncpa [#allocation4], 0
    %s13 = scalar_lea.sflag [#allocation4], 1
    %14 = vsyncpa %s13, 0
    loop: start=0, step=1, limit=4
    $region2: #{tpu_custom_call.1} parent=1 // loop_pre_header
      _
    $region3: #{tpu_custom_call.1} parent=1 // loop_header
      %s16 = sphi 0, %s20
      %p17 = scmp.ge.s32.totalorder %s16, 4
      %s26 = sphi 0, %s28
      %s29 = sphi 0, %s26
      %s30 = sphi 0, %s29
      %s46 = sphi 0, %s30
      %s50 = sphi 0, %s50
      %s52 = sphi 0, %s50
      %s53 = sphi 0, %s52
      %s67 = sphi 0, %s53
      %s71 = sphi 0, %s71
      %s73 = sphi 0, %s71
      %s74 = sphi 0, %s73
      %s88 = sphi 0, %s74
      %s92 = sphi 0, %s92
      %s94 = sphi 0, %s92
      %s95 = sphi 0, %s94
      %s109 = sphi 0, %s95
      %s115 = sphi 0, %s117
      %s118 = sphi 0, %s115
      %s119 = sphi 0, %s118
      %s135 = sphi 0, %s119
    $region4: #{tpu_custom_call.1} parent=1 // loop_header_branch
      %19 = sbr.rel (%p17) target = $region8
    $region5: #{tpu_custom_call.1} parent=1 // loop_body
      %s21 = ssub.s32 %s16, 1
      %s22 = ssub.s32 %s16, 2
      %s23 = sadd.s32 %s16, 1
      %s24 = ssub.s32 %s16, %s23
      %p25 = scmp.eq.s32.totalorder %s24, 0
      %s27 = sadd.s32 %s26, 1
      %s28 = scalar_select %p25, %s26, %s27
      %p31 = pneg %p25
      %p32 = scmp.eq.s32.totalorder %s16, 1
      %p33 = por %p31, %p32
      %p34 = scmp.ne.s32.totalorder %s26, %s29
      %p35 = scmp.eq.s32.totalorder %s16, 0
      %p36 = por %p34, %p35
      %p37 = scmp.ne.s32.totalorder %s26, %s29
      %p38 = scmp.eq.s32.totalorder %s21, 1
      %p39 = por %p37, %p38
      %p40 = scmp.ne.s32.totalorder %s29, %s30
      %p41 = scmp.eq.s32.totalorder %s21, 0
      %p42 = por %p40, %p41
      %p43 = scmp.ne.s32.totalorder %s29, %s30
      %p44 = scmp.eq.s32.totalorder %s22, 1
      %p45 = por %p43, %p44
      %p47 = scmp.ne.s32.totalorder %s30, %s46
      %p48 = scmp.eq.s32.totalorder %s22, 0
      %p49 = por %p47, %p48
      %s51 = sadd.s32 %s50, 1
      %p54 = scmp.eq.s32.totalorder %s16, 1
      %p55 = scmp.ne.s32.totalorder %s50, %s52
      %p56 = scmp.eq.s32.totalorder %s16, 0
      %p57 = por %p55, %p56
      %p58 = scmp.ne.s32.totalorder %s50, %s52
      %p59 = scmp.eq.s32.totalorder %s21, 1
      %p60 = por %p58, %p59
      %p61 = scmp.ne.s32.totalorder %s52, %s53
      %p62 = scmp.eq.s32.totalorder %s21, 0
      %p63 = por %p61, %p62
      %p64 = scmp.ne.s32.totalorder %s52, %s53
      %p65 = scmp.eq.s32.totalorder %s22, 1
      %p66 = por %p64, %p65
      %p68 = scmp.ne.s32.totalorder %s53, %s67
      %p69 = scmp.eq.s32.totalorder %s22, 0
      %p70 = por %p68, %p69
      %s72 = sadd.s32 %s71, 1
      %p75 = scmp.eq.s32.totalorder %s16, 1
      %p76 = scmp.ne.s32.totalorder %s71, %s73
      %p77 = scmp.eq.s32.totalorder %s16, 0
      %p78 = por %p76, %p77
      %p79 = scmp.ne.s32.totalorder %s71, %s73
      %p80 = scmp.eq.s32.totalorder %s21, 1
      %p81 = por %p79, %p80
      %p82 = scmp.ne.s32.totalorder %s73, %s74
      %p83 = scmp.eq.s32.totalorder %s21, 0
      %p84 = por %p82, %p83
      %p85 = scmp.ne.s32.totalorder %s73, %s74
      %p86 = scmp.eq.s32.totalorder %s22, 1
      %p87 = por %p85, %p86
      %p89 = scmp.ne.s32.totalorder %s74, %s88
      %p90 = scmp.eq.s32.totalorder %s22, 0
      %p91 = por %p89, %p90
      %s93 = sadd.s32 %s92, 1
      %p96 = scmp.eq.s32.totalorder %s16, 1
      %p97 = scmp.ne.s32.totalorder %s92, %s94
      %p98 = scmp.eq.s32.totalorder %s16, 0
      %p99 = por %p97, %p98
      %p100 = scmp.ne.s32.totalorder %s92, %s94
      %p101 = scmp.eq.s32.totalorder %s21, 1
      %p102 = por %p100, %p101
      %p103 = scmp.ne.s32.totalorder %s94, %s95
      %p104 = scmp.eq.s32.totalorder %s21, 0
      %p105 = por %p103, %p104
      %p106 = scmp.ne.s32.totalorder %s94, %s95
      %p107 = scmp.eq.s32.totalorder %s22, 1
      %p108 = por %p106, %p107
      %p110 = scmp.ne.s32.totalorder %s95, %s109
      %p111 = scmp.eq.s32.totalorder %s22, 0
      %p112 = por %p110, %p111
      %s113 = ssub.s32 %s16, %s23
      %p114 = scmp.eq.s32.totalorder %s113, 0
      %s116 = sadd.s32 %s115, 1
      %s117 = scalar_select %p114, %s115, %s116
      %p120 = pneg %p114
      %p121 = scmp.eq.s32.totalorder %s16, 1
      %p122 = por %p120, %p121
      %p123 = scmp.ne.s32.totalorder %s115, %s118
      %p124 = scmp.eq.s32.totalorder %s16, 0
      %p125 = por %p123, %p124
      %p126 = scmp.ne.s32.totalorder %s115, %s118
      %p127 = scmp.eq.s32.totalorder %s21, 1
      %p128 = por %p126, %p127
      %p129 = scmp.ne.s32.totalorder %s118, %s119
      %p130 = scmp.eq.s32.totalorder %s21, 0
      %p131 = por %p129, %p130
      %p132 = scmp.ne.s32.totalorder %s118, %s119
      %p133 = scmp.eq.s32.totalorder %s22, 1
      %p134 = por %p132, %p133
      %p136 = scmp.ne.s32.totalorder %s119, %s135
      %p137 = scmp.eq.s32.totalorder %s22, 0
      %p138 = por %p136, %p137
      %p139 = scmp.le.s32.totalorder 1, %s16
      %p140 = scmp.lt.s32.totalorder %s16, 3
      %p141 = pnand %p139, %p140
      %p142 = pneg %p141
      // Predicated region
      $region9: #{tpu_custom_call.1} parent=5 // pred_check
        _
      $region10: #{tpu_custom_call.1} parent=5 // pred_check_branch
        %144 = sbr.rel (%p141) target = $region12
      $region11: #{tpu_custom_call.1} parent=5 // pred_region
        %s145 = ssub.s32 %s16, 1
        // Predicated region
        $region13: #{tpu_custom_call.1} parent=11 // pred_check
          %p146 = pneg %p63
        $region14: #{tpu_custom_call.1} parent=11 // pred_check_branch
          %148 = sbr.rel (%p146) target = $region16
        $region15: #{tpu_custom_call.1} parent=11 // pred_region
          _
        $region16: #{tpu_custom_call.1} parent=11 // pred_fallthru
          _
        // Predicated region
        $region17: #{tpu_custom_call.1} parent=11 // pred_check
          %p149 = pneg %p84
        $region18: #{tpu_custom_call.1} parent=11 // pred_check_branch
          %151 = sbr.rel (%p149) target = $region20
        $region19: #{tpu_custom_call.1} parent=11 // pred_region
          _
        $region20: #{tpu_custom_call.1} parent=11 // pred_fallthru
          _
        // Predicated region
        $region21: #{tpu_custom_call.1} parent=11 // pred_check
          %p152 = pneg %p105
        $region22: #{tpu_custom_call.1} parent=11 // pred_check_branch
          %154 = sbr.rel (%p152) target = $region24
        $region23: #{tpu_custom_call.1} parent=11 // pred_region
          _
        $region24: #{tpu_custom_call.1} parent=11 // pred_fallthru
          _
      $region12: #{tpu_custom_call.1} parent=5 // pred_fallthru
        _
      %p155 = scmp.lt.s32.totalorder %s16, 2
      // Predicated region
      $region25: #{tpu_custom_call.1} parent=5 // pred_check
        %p156 = pneg %p155
      $region26: #{tpu_custom_call.1} parent=5 // pred_check_branch
        %158 = sbr.rel (%p156) target = $region28
      $region27: #{tpu_custom_call.1} parent=5 // pred_region
        // Predicated region
        $region29: #{tpu_custom_call.1} parent=27 // pred_check
          %p159 = pneg %p36
        $region30: #{tpu_custom_call.1} parent=27 // pred_check_branch
          %161 = sbr.rel (%p159) target = $region32
        $region31: #{tpu_custom_call.1} parent=27 // pred_region
          %s162 = sand.u32 %s26, 1
          %s163 = scalar_lea.sflag [#allocation3], %s162
          %s164 = sand.u32 %s26, 1
          %s165 = smul.addr %s164, 6
          %s166 = scalar_lea.vmem [#allocation2], %s165
          %s168 = ssub.s32 96, 96
          %169 = vsyncadd %s163, %s168
          %s170 = smul.addr %s16, 3
          %s171 = smul.addr %s170, 32
          %s172 = scalar_lea.hbm %s0, %s171
          %s174 = sshll.u32 %s166, 4
          %s175 = int_to_ptr.vmem [resolvable:$true] %s174
          %177 = dma.hbm_to_vmem [thread:$0]  %s172, 96, %s175, %s163
        $region32: #{tpu_custom_call.1} parent=27 // pred_fallthru
          _
      $region28: #{tpu_custom_call.1} parent=5 // pred_fallthru
        _
      %p178 = scmp.le.s32.totalorder 1, %s16
      %p179 = scmp.lt.s32.totalorder %s16, 3
      %p180 = pnand %p178, %p179
      %p181 = pneg %p180
      // Predicated region
      $region33: #{tpu_custom_call.1} parent=5 // pred_check
        _
      $region34: #{tpu_custom_call.1} parent=5 // pred_check_branch
        %183 = sbr.rel (%p180) target = $region36
      $region35: #{tpu_custom_call.1} parent=5 // pred_region
        %s184 = ssub.s32 %s16, 1
        %s185 = sand.u32 %s29, 1
        %s186 = scalar_lea.sflag [#allocation3], %s185
        %s187 = sand.u32 %s29, 1
        %s188 = smul.addr %s187, 6
        %s189 = scalar_lea.vmem [#allocation2], %s188
        // Predicated region
        $region37: #{tpu_custom_call.1} parent=35 // pred_check
          %p190 = pneg %p42
        $region38: #{tpu_custom_call.1} parent=35 // pred_check_branch
          %192 = sbr.rel (%p190) target = $region40
        $region39: #{tpu_custom_call.1} parent=35 // pred_region
          %193 = dma.done %s186, 96
        $region40: #{tpu_custom_call.1} parent=35 // pred_fallthru
          _
        %s194 = sand.u32 %s29, 1
        %s195 = scalar_lea.sflag [#allocation3], %s194
        %s196 = sand.u32 %s29, 1
        %s197 = smul.addr %s196, 6
        %s198 = scalar_lea.vmem [#allocation2], %s197
        %p199 = pneg %p42
        %p200 = pneg %p39
        %p201 = pneg %p63
        %p202 = pneg %p60
        %p203 = pneg %p84
        %p204 = pneg %p81
        %p205 = pneg %p105
        %p206 = pneg %p102
        %p207 = pneg %p131
        %p208 = pneg %p128
        %s209 = sand.u32 %s118, 1
        %s210 = scalar_lea.sflag [#allocation4], %s209
        %s211 = sand.u32 %s118, 1
        %s212 = smul.addr %s211, 8
        %s213 = scalar_lea.vmem [#allocation5], %s212
        %v215 = vld [vmem:[%s189] sm:$0xf]
        %v216 = vld [vmem:[%s1] sm:$0xf]
        %v219 = vunpack.c.l.s4 1983009808
        %v220 = vunpack.c.0.s8 %v219
        %v221 = vlaneseq
        %v222 = vshrl.u32 %v221, 7
        %v223 = vsub.s32 %v220, %v222
        %v224 = vrot.slane %v215, %v223
        %v225 = vcombine.high %v224, %v224
        %vm226 = vcmask 31744
        %v228 = vsel %vm226, %v216, 0
        %vm230 = vcmask 1041408
        %v232 = vsel %vm230, %v224, 0
        %v235 = vsel %vm230, %v225, 0
        %237 = vmatprep.subr.bf16.mxu0 0
        %238 = vmatpush1.bf16.msra.mxu0 0
        %239 = vmatprep.subr.bf16.mxu0 0
        %240 = vmatpush1.bf16.msra.mxu0 0
        %241 = vmatprep.subr.bf16.mxu0 0
        %242 = vmatpush1.bf16.msra.mxu0 0
        %243 = vmatprep.subr.bf16.mxu0 0
        %244 = vmatpush1.bf16.msra.mxu0 0
        %245 = vmatprep.subr.bf16.mxu0 0
        %246 = vmatpush1.bf16.msra.mxu0 0
        %247 = vmatprep.subr.bf16.mxu0 0
        %248 = vmatpush1.bf16.msra.mxu0 0
        %249 = vmatprep.subr.bf16.mxu0 0
        %250 = vmatpush1.bf16.msra.mxu0 0
        %251 = vmatprep.subr.bf16.mxu0 %v235
        %252 = vmatpush1.bf16.msra.mxu0 %v232
        %253 = vmatprep.subr.bf16.mxu0 0
        %254 = vmatpush2.bf16.msra.mxu0 0
        %255 = vmatprep.subr.bf16.mxu0 0
        %256 = vmatpush2.bf16.msra.mxu0 0
        %257 = vmatprep.subr.bf16.mxu0 0
        %258 = vmatpush2.bf16.msra.mxu0 0
        %259 = vmatprep.subr.bf16.mxu0 0
        %260 = vmatpush2.bf16.msra.mxu0 0
        %261 = vmatprep.subr.bf16.mxu0 0
        %262 = vmatpush2.bf16.msra.mxu0 0
        %263 = vmatprep.subr.bf16.mxu0 0
        %264 = vmatpush2.bf16.msra.mxu0 0
        %265 = vmatprep.subr.bf16.mxu0 0
        %266 = vmatpush2.bf16.msra.mxu0 0
        %267 = vmatprep.subr.bf16.mxu0 0
        %268 = vmatpush2.bf16.msra.mxu0 0
        %269 = vmatprep.mubr.bf16.mxu0 0
        %270 = vmatmul.mubr.bf16.gmra.mxu0 %v228
        %v271 = vpop.f32.mrf.mxu0
        %v272 = vadd.f32 0.0, %v271
        %v273 = vpop.f32.mrf.mxu0
        %v274 = vadd.f32 0.0, %v273
        %v275 = vpop.f32.mrf.mxu0
        %v276 = vpop.f32.mrf.mxu0
        %277 = vdwg.mxu0
        %v278 = vld [vmem:[%s3] ss:$2 sm:$0x3]
        %v280 = vlaneseq
        %v281 = vshrl.u32 %v280, 7
        %v282 = vsub.s32 0, %v281
        %v283 = vrot.slane %v278, %v282
        %v284 = vlaneseq
        %v285 = vshrl.u32 %v284, 7
        %v286 = vsub.s32 1, %v285
        %v287 = vrot.slane %v278, %v286
        %v290 = vmul.f32 %v272, %v283
        %v291 = vmul.f32 %v274, %v287
        %v292 = vadd.f32 %v290, 0.0
        %v293 = vadd.f32 %v291, 0.0
        %v294 = vld [vmem:[%s189] sm:$0x3f]
        %v295 = vld [vmem:[%s1] sm:$0xf]
        %v297 = vunpack.c.l.b16 %v295
        %v298 = vpack.c.b16 %v297, %v297
        %299 = vrot.lane.b32.xlu0 %v298, 124
        %v300 = vpop.permute.xlu0 %299
        %v302 = vcombine.high %v294, %v294
        %v304 = vunpack.c.l.s4 1983009808
        %v305 = vunpack.c.0.s8 %v304
        %v306 = vlaneseq
        %v307 = vshrl.u32 %v306, 7
        %v308 = vsub.s32 %v305, %v307
        %v309 = vrot.slane %v294, %v308
        %v311 = vunpack.c.l.s4 1983009808
        %v312 = vunpack.c.0.s8 %v311
        %v313 = vlaneseq
        %v314 = vshrl.u32 %v313, 7
        %v315 = vsub.s32 %v312, %v314
        %v316 = vrot.slane %v302, %v315
        %v317 = vcombine.high %v309, %v309
        %318 = vrot.lane.b32.xlu0 %v309, 127
        %v319 = vpop.permute.xlu0 %318
        %320 = vrot.lane.b32.xlu0 %v317, 127
        %v321 = vpop.permute.xlu0 %320
        %322 = vrot.lane.b32.xlu0 %v316, 127
        %v323 = vpop.permute.xlu0 %322
        %vm324 = vcmask 1039360
        %v325 = vsel %vm324, %v319, %v321
        %v326 = vsel %vm324, %v321, %v323
        %v328 = vsel %vm226, %v300, 0
        %v331 = vsel %vm230, %v325, 0
        %v334 = vsel %vm230, %v326, 0
        %336 = vmatprep.subr.bf16.mxu0 0
        %337 = vmatpush1.bf16.msra.mxu0 0
        %338 = vmatprep.subr.bf16.mxu0 0
        %339 = vmatpush1.bf16.msra.mxu0 0
        %340 = vmatprep.subr.bf16.mxu0 0
        %341 = vmatpush1.bf16.msra.mxu0 0
        %342 = vmatprep.subr.bf16.mxu0 0
        %343 = vmatpush1.bf16.msra.mxu0 0
        %344 = vmatprep.subr.bf16.mxu0 0
        %345 = vmatpush1.bf16.msra.mxu0 0
        %346 = vmatprep.subr.bf16.mxu0 0
        %347 = vmatpush1.bf16.msra.mxu0 0
        %348 = vmatprep.subr.bf16.mxu0 0
        %349 = vmatpush1.bf16.msra.mxu0 0
        %350 = vmatprep.subr.bf16.mxu0 %v334
        %351 = vmatpush1.bf16.msra.mxu0 %v331
        %352 = vmatprep.subr.bf16.mxu0 0
        %353 = vmatpush2.bf16.msra.mxu0 0
        %354 = vmatprep.subr.bf16.mxu0 0
        %355 = vmatpush2.bf16.msra.mxu0 0
        %356 = vmatprep.subr.bf16.mxu0 0
        %357 = vmatpush2.bf16.msra.mxu0 0
        %358 = vmatprep.subr.bf16.mxu0 0
        %359 = vmatpush2.bf16.msra.mxu0 0
        %360 = vmatprep.subr.bf16.mxu0 0
        %361 = vmatpush2.bf16.msra.mxu0 0
        %362 = vmatprep.subr.bf16.mxu0 0
        %363 = vmatpush2.bf16.msra.mxu0 0
        %364 = vmatprep.subr.bf16.mxu0 0
        %365 = vmatpush2.bf16.msra.mxu0 0
        %366 = vmatprep.subr.bf16.mxu0 0
        %367 = vmatpush2.bf16.msra.mxu0 0
        %368 = vmatprep.mubr.bf16.mxu0 0
        %369 = vmatmul.mubr.bf16.gmra.mxu0 %v328
        %v370 = vpop.f32.mrf.mxu0
        %v371 = vadd.f32 0.0, %v370
        %v372 = vpop.f32.mrf.mxu0
        %v373 = vadd.f32 0.0, %v372
        %v374 = vpop.f32.mrf.mxu0
        %v375 = vpop.f32.mrf.mxu0
        %376 = vdwg.mxu0
        %v377 = vadd.f32 %v292, %v371
        %v378 = vadd.f32 %v293, %v373
        %v379 = vld [vmem:[%s189] sm:$0x3f]
        %v380 = vld [vmem:[%s1] sm:$0xf]
        %v382 = vunpack.c.l.b16 %v380
        %v383 = vpack.c.b16 %v382, %v382
        %384 = vrot.lane.b32.xlu0 %v383, 120
        %v385 = vpop.permute.xlu0 %384
        %v387 = vcombine.high %v379, %v379
        %v389 = vunpack.c.l.s4 1983009808
        %v390 = vunpack.c.0.s8 %v389
        %v391 = vlaneseq
        %v392 = vshrl.u32 %v391, 7
        %v393 = vsub.s32 %v390, %v392
        %v394 = vrot.slane %v379, %v393
        %v396 = vunpack.c.l.s4 1983009808
        %v397 = vunpack.c.0.s8 %v396
        %v398 = vlaneseq
        %v399 = vshrl.u32 %v398, 7
        %v400 = vsub.s32 %v397, %v399
        %v401 = vrot.slane %v387, %v400
        %v402 = vcombine.high %v394, %v394
        %403 = vrot.lane.b32.xlu0 %v394, 126
        %v404 = vpop.permute.xlu0 %403
        %405 = vrot.lane.b32.xlu0 %v402, 126
        %v406 = vpop.permute.xlu0 %405
        %407 = vrot.lane.b32.xlu0 %v401, 126
        %v408 = vpop.permute.xlu0 %407
        %vm409 = vcmask 1031168
        %v410 = vsel %vm409, %v404, %v406
        %v411 = vsel %vm409, %v406, %v408
        %v413 = vsel %vm226, %v385, 0
        %v416 = vsel %vm230, %v410, 0
        %v419 = vsel %vm230, %v411, 0
        %421 = vmatprep.subr.bf16.mxu0 0
        %422 = vmatpush1.bf16.msra.mxu0 0
        %423 = vmatprep.subr.bf16.mxu0 0
        %424 = vmatpush1.bf16.msra.mxu0 0
        %425 = vmatprep.subr.bf16.mxu0 0
        %426 = vmatpush1.bf16.msra.mxu0 0
        %427 = vmatprep.subr.bf16.mxu0 0
        %428 = vmatpush1.bf16.msra.mxu0 0
        %429 = vmatprep.subr.bf16.mxu0 0
        %430 = vmatpush1.bf16.msra.mxu0 0
        %431 = vmatprep.subr.bf16.mxu0 0
        %432 = vmatpush1.bf16.msra.mxu0 0
        %433 = vmatprep.subr.bf16.mxu0 0
        %434 = vmatpush1.bf16.msra.mxu0 0
        %435 = vmatprep.subr.bf16.mxu0 %v419
        %436 = vmatpush1.bf16.msra.mxu0 %v416
        %437 = vmatprep.subr.bf16.mxu0 0
        %438 = vmatpush2.bf16.msra.mxu0 0
        %439 = vmatprep.subr.bf16.mxu0 0
        %440 = vmatpush2.bf16.msra.mxu0 0
        %441 = vmatprep.subr.bf16.mxu0 0
        %442 = vmatpush2.bf16.msra.mxu0 0
        %443 = vmatprep.subr.bf16.mxu0 0
        %444 = vmatpush2.bf16.msra.mxu0 0
        %445 = vmatprep.subr.bf16.mxu0 0
        %446 = vmatpush2.bf16.msra.mxu0 0
        %447 = vmatprep.subr.bf16.mxu0 0
        %448 = vmatpush2.bf16.msra.mxu0 0
        %449 = vmatprep.subr.bf16.mxu0 0
        %450 = vmatpush2.bf16.msra.mxu0 0
        %451 = vmatprep.subr.bf16.mxu0 0
        %452 = vmatpush2.bf16.msra.mxu0 0
        %453 = vmatprep.mubr.bf16.mxu0 0
        %454 = vmatmul.mubr.bf16.gmra.mxu0 %v413
        %v455 = vpop.f32.mrf.mxu0
        %v456 = vadd.f32 0.0, %v455
        %v457 = vpop.f32.mrf.mxu0
        %v458 = vadd.f32 0.0, %v457
        %v459 = vpop.f32.mrf.mxu0
        %v460 = vpop.f32.mrf.mxu0
        %461 = vdwg.mxu0
        %s462 = scalar_lea.vmem %s3, 1
        %v463 = vld [vmem:[%s462] ss:$2 sm:$0x3]
        %v465 = vlaneseq
        %v466 = vshrl.u32 %v465, 7
        %v467 = vsub.s32 0, %v466
        %v468 = vrot.slane %v463, %v467
        %v469 = vlaneseq
        %v470 = vshrl.u32 %v469, 7
        %v471 = vsub.s32 1, %v470
        %v472 = vrot.slane %v463, %v471
        %v475 = vmul.f32 %v456, %v468
        %v476 = vmul.f32 %v458, %v472
        %v477 = vadd.f32 %v377, %v475
        %v478 = vadd.f32 %v378, %v476
        %v479 = vld [vmem:[%s189] sm:$0x3f]
        %v480 = vld [vmem:[%s1] sm:$0xf]
        %v482 = vunpack.c.l.b16 %v480
        %v483 = vpack.c.b16 %v482, %v482
        %484 = vrot.lane.b32.xlu0 %v483, 116
        %v485 = vpop.permute.xlu0 %484
        %v487 = vcombine.high %v479, %v479
        %v489 = vunpack.c.l.s4 1983009808
        %v490 = vunpack.c.0.s8 %v489
        %v491 = vlaneseq
        %v492 = vshrl.u32 %v491, 7
        %v493 = vsub.s32 %v490, %v492
        %v494 = vrot.slane %v479, %v493
        %v496 = vunpack.c.l.s4 1983009808
        %v497 = vunpack.c.0.s8 %v496
        %v498 = vlaneseq
        %v499 = vshrl.u32 %v498, 7
        %v500 = vsub.s32 %v497, %v499
        %v501 = vrot.slane %v487, %v500
        %v502 = vcombine.high %v494, %v494
        %503 = vrot.lane.b32.xlu0 %v494, 112
        %v504 = vpop.permute.xlu0 %503
        %505 = vrot.lane.b32.xlu0 %v502, 112
        %v506 = vpop.permute.xlu0 %505
        %507 = vrot.lane.b32.xlu0 %v501, 112
        %v508 = vpop.permute.xlu0 %507
        %vm509 = vcmask 916480
        %v510 = vsel %vm509, %v504, %v506
        %v511 = vsel %vm509, %v506, %v508
        %v513 = vsel %vm226, %v485, 0
        %v516 = vsel %vm230, %v510, 0
        %v519 = vsel %vm230, %v511, 0
        %521 = vmatprep.subr.bf16.mxu0 0
        %522 = vmatpush1.bf16.msra.mxu0 0
        %523 = vmatprep.subr.bf16.mxu0 0
        %524 = vmatpush1.bf16.msra.mxu0 0
        %525 = vmatprep.subr.bf16.mxu0 0
        %526 = vmatpush1.bf16.msra.mxu0 0
        %527 = vmatprep.subr.bf16.mxu0 0
        %528 = vmatpush1.bf16.msra.mxu0 0
        %529 = vmatprep.subr.bf16.mxu0 0
        %530 = vmatpush1.bf16.msra.mxu0 0
        %531 = vmatprep.subr.bf16.mxu0 0
        %532 = vmatpush1.bf16.msra.mxu0 0
        %533 = vmatprep.subr.bf16.mxu0 0
        %534 = vmatpush1.bf16.msra.mxu0 0
        %535 = vmatprep.subr.bf16.mxu0 %v519
        %536 = vmatpush1.bf16.msra.mxu0 %v516
        %537 = vmatprep.subr.bf16.mxu0 0
        %538 = vmatpush2.bf16.msra.mxu0 0
        %539 = vmatprep.subr.bf16.mxu0 0
        %540 = vmatpush2.bf16.msra.mxu0 0
        %541 = vmatprep.subr.bf16.mxu0 0
        %542 = vmatpush2.bf16.msra.mxu0 0
        %543 = vmatprep.subr.bf16.mxu0 0
        %544 = vmatpush2.bf16.msra.mxu0 0
        %545 = vmatprep.subr.bf16.mxu0 0
        %546 = vmatpush2.bf16.msra.mxu0 0
        %547 = vmatprep.subr.bf16.mxu0 0
        %548 = vmatpush2.bf16.msra.mxu0 0
        %549 = vmatprep.subr.bf16.mxu0 0
        %550 = vmatpush2.bf16.msra.mxu0 0
        %551 = vmatprep.subr.bf16.mxu0 0
        %552 = vmatpush2.bf16.msra.mxu0 0
        %553 = vmatprep.mubr.bf16.mxu0 0
        %554 = vmatmul.mubr.bf16.gmra.mxu0 %v513
        %v555 = vpop.f32.mrf.mxu0
        %v556 = vadd.f32 0.0, %v555
        %v557 = vpop.f32.mrf.mxu0
        %v558 = vadd.f32 0.0, %v557
        %v559 = vpop.f32.mrf.mxu0
        %v560 = vpop.f32.mrf.mxu0
        %561 = vdwg.mxu0
        %v562 = vmul.f32 %v556, %v283
        %v563 = vmul.f32 %v558, %v287
        %v564 = vadd.f32 %v477, %v562
        %v565 = vadd.f32 %v478, %v563
        %v566 = vld [vmem:[%s189] sm:$0x3f]
        %v567 = vld [vmem:[%s1] sm:$0xf]
        %v569 = vunpack.c.l.b16 %v567
        %v570 = vpack.c.b16 %v569, %v569
        %571 = vrot.lane.b32.xlu0 %v570, 112
        %v572 = vpop.permute.xlu0 %571
        %v574 = vcombine.high %v566, %v566
        %v576 = vunpack.c.l.s4 1983009808
        %v577 = vunpack.c.0.s8 %v576
        %v578 = vlaneseq
        %v579 = vshrl.u32 %v578, 7
        %v580 = vsub.s32 %v577, %v579
        %v581 = vrot.slane %v566, %v580
        %v583 = vunpack.c.l.s4 1983009808
        %v584 = vunpack.c.0.s8 %v583
        %v585 = vlaneseq
        %v586 = vshrl.u32 %v585, 7
        %v587 = vsub.s32 %v584, %v586
        %v588 = vrot.slane %v574, %v587
        %v589 = vcombine.high %v581, %v581
        %590 = vrot.lane.b32.xlu0 %v581, 111
        %v591 = vpop.permute.xlu0 %590
        %592 = vrot.lane.b32.xlu0 %v589, 111
        %v593 = vpop.permute.xlu0 %592
        %594 = vrot.lane.b32.xlu0 %v588, 111
        %v595 = vpop.permute.xlu0 %594
        %vm596 = vcmask 908288
        %v597 = vsel %vm596, %v591, %v593
        %v598 = vsel %vm596, %v593, %v595
        %v600 = vsel %vm226, %v572, 0
        %v603 = vsel %vm230, %v597, 0
        %v606 = vsel %vm230, %v598, 0
        %608 = vmatprep.subr.bf16.mxu0 0
        %609 = vmatpush1.bf16.msra.mxu0 0
        %610 = vmatprep.subr.bf16.mxu0 0
        %611 = vmatpush1.bf16.msra.mxu0 0
        %612 = vmatprep.subr.bf16.mxu0 0
        %613 = vmatpush1.bf16.msra.mxu0 0
        %614 = vmatprep.subr.bf16.mxu0 0
        %615 = vmatpush1.bf16.msra.mxu0 0
        %616 = vmatprep.subr.bf16.mxu0 0
        %617 = vmatpush1.bf16.msra.mxu0 0
        %618 = vmatprep.subr.bf16.mxu0 0
        %619 = vmatpush1.bf16.msra.mxu0 0
        %620 = vmatprep.subr.bf16.mxu0 0
        %621 = vmatpush1.bf16.msra.mxu0 0
        %622 = vmatprep.subr.bf16.mxu0 %v606
        %623 = vmatpush1.bf16.msra.mxu0 %v603
        %624 = vmatprep.subr.bf16.mxu0 0
        %625 = vmatpush2.bf16.msra.mxu0 0
        %626 = vmatprep.subr.bf16.mxu0 0
        %627 = vmatpush2.bf16.msra.mxu0 0
        %628 = vmatprep.subr.bf16.mxu0 0
        %629 = vmatpush2.bf16.msra.mxu0 0
        %630 = vmatprep.subr.bf16.mxu0 0
        %631 = vmatpush2.bf16.msra.mxu0 0
        %632 = vmatprep.subr.bf16.mxu0 0
        %633 = vmatpush2.bf16.msra.mxu0 0
        %634 = vmatprep.subr.bf16.mxu0 0
        %635 = vmatpush2.bf16.msra.mxu0 0
        %636 = vmatprep.subr.bf16.mxu0 0
        %637 = vmatpush2.bf16.msra.mxu0 0
        %638 = vmatprep.subr.bf16.mxu0 0
        %639 = vmatpush2.bf16.msra.mxu0 0
        %640 = vmatprep.mubr.bf16.mxu0 0
        %641 = vmatmul.mubr.bf16.gmra.mxu0 %v600
        %v642 = vpop.f32.mrf.mxu0
        %v643 = vadd.f32 0.0, %v642
        %v644 = vpop.f32.mrf.mxu0
        %v645 = vadd.f32 0.0, %v644
        %v646 = vpop.f32.mrf.mxu0
        %v647 = vpop.f32.mrf.mxu0
        %648 = vdwg.mxu0
        %v649 = vadd.f32 %v564, %v643
        %v650 = vadd.f32 %v565, %v645
        %v651 = vld [vmem:[%s189] sm:$0x3f]
        %v652 = vld [vmem:[%s1] sm:$0xf]
        %v654 = vunpack.c.l.b16 %v652
        %v655 = vpack.c.b16 %v654, %v654
        %656 = vrot.lane.b32.xlu0 %v655, 108
        %v657 = vpop.permute.xlu0 %656
        %v659 = vcombine.high %v651, %v651
        %v661 = vunpack.c.l.s4 1983009808
        %v662 = vunpack.c.0.s8 %v661
        %v663 = vlaneseq
        %v664 = vshrl.u32 %v663, 7
        %v665 = vsub.s32 %v662, %v664
        %v666 = vrot.slane %v651, %v665
        %v668 = vunpack.c.l.s4 1983009808
        %v669 = vunpack.c.0.s8 %v668
        %v670 = vlaneseq
        %v671 = vshrl.u32 %v670, 7
        %v672 = vsub.s32 %v669, %v671
        %v673 = vrot.slane %v659, %v672
        %v674 = vcombine.high %v666, %v666
        %675 = vrot.lane.b32.xlu0 %v666, 110
        %v676 = vpop.permute.xlu0 %675
        %677 = vrot.lane.b32.xlu0 %v674, 110
        %v678 = vpop.permute.xlu0 %677
        %679 = vrot.lane.b32.xlu0 %v673, 110
        %v680 = vpop.permute.xlu0 %679
        %vm681 = vcmask 900096
        %v682 = vsel %vm681, %v676, %v678
        %v683 = vsel %vm681, %v678, %v680
        %v685 = vsel %vm226, %v657, 0
        %v688 = vsel %vm230, %v682, 0
        %v691 = vsel %vm230, %v683, 0
        %693 = vmatprep.subr.bf16.mxu0 0
        %694 = vmatpush1.bf16.msra.mxu0 0
        %695 = vmatprep.subr.bf16.mxu0 0
        %696 = vmatpush1.bf16.msra.mxu0 0
        %697 = vmatprep.subr.bf16.mxu0 0
        %698 = vmatpush1.bf16.msra.mxu0 0
        %699 = vmatprep.subr.bf16.mxu0 0
        %700 = vmatpush1.bf16.msra.mxu0 0
        %701 = vmatprep.subr.bf16.mxu0 0
        %702 = vmatpush1.bf16.msra.mxu0 0
        %703 = vmatprep.subr.bf16.mxu0 0
        %704 = vmatpush1.bf16.msra.mxu0 0
        %705 = vmatprep.subr.bf16.mxu0 0
        %706 = vmatpush1.bf16.msra.mxu0 0
        %707 = vmatprep.subr.bf16.mxu0 %v691
        %708 = vmatpush1.bf16.msra.mxu0 %v688
        %709 = vmatprep.subr.bf16.mxu0 0
        %710 = vmatpush2.bf16.msra.mxu0 0
        %711 = vmatprep.subr.bf16.mxu0 0
        %712 = vmatpush2.bf16.msra.mxu0 0
        %713 = vmatprep.subr.bf16.mxu0 0
        %714 = vmatpush2.bf16.msra.mxu0 0
        %715 = vmatprep.subr.bf16.mxu0 0
        %716 = vmatpush2.bf16.msra.mxu0 0
        %717 = vmatprep.subr.bf16.mxu0 0
        %718 = vmatpush2.bf16.msra.mxu0 0
        %719 = vmatprep.subr.bf16.mxu0 0
        %720 = vmatpush2.bf16.msra.mxu0 0
        %721 = vmatprep.subr.bf16.mxu0 0
        %722 = vmatpush2.bf16.msra.mxu0 0
        %723 = vmatprep.subr.bf16.mxu0 0
        %724 = vmatpush2.bf16.msra.mxu0 0
        %725 = vmatprep.mubr.bf16.mxu0 0
        %726 = vmatmul.mubr.bf16.gmra.mxu0 %v685
        %v727 = vpop.f32.mrf.mxu0
        %v728 = vadd.f32 0.0, %v727
        %v729 = vpop.f32.mrf.mxu0
        %v730 = vadd.f32 0.0, %v729
        %v731 = vpop.f32.mrf.mxu0
        %v732 = vpop.f32.mrf.mxu0
        %733 = vdwg.mxu0
        %v734 = vmul.f32 %v728, %v468
        %v735 = vmul.f32 %v730, %v472
        %v736 = vadd.f32 %v649, %v734
        %v737 = vadd.f32 %v650, %v735
        %v738 = vld [vmem:[%s189] sm:$0x3f]
        %v739 = vld [vmem:[%s1] sm:$0xf]
        %v741 = vunpack.c.l.b16 %v739
        %v742 = vpack.c.b16 %v741, %v741
        %743 = vrot.lane.b32.xlu0 %v742, 104
        %v744 = vpop.permute.xlu0 %743
        %v746 = vcombine.high %v738, %v738
        %v748 = vunpack.c.l.s4 1983009808
        %v749 = vunpack.c.0.s8 %v748
        %v750 = vlaneseq
        %v751 = vshrl.u32 %v750, 7
        %v752 = vsub.s32 %v749, %v751
        %v753 = vrot.slane %v738, %v752
        %v755 = vunpack.c.l.s4 1983009808
        %v756 = vunpack.c.0.s8 %v755
        %v757 = vlaneseq
        %v758 = vshrl.u32 %v757, 7
        %v759 = vsub.s32 %v756, %v758
        %v760 = vrot.slane %v746, %v759
        %v761 = vcombine.high %v753, %v753
        %762 = vrot.lane.b32.xlu0 %v753, 96
        %v763 = vpop.permute.xlu0 %762
        %764 = vrot.lane.b32.xlu0 %v761, 96
        %v765 = vpop.permute.xlu0 %764
        %766 = vrot.lane.b32.xlu0 %v760, 96
        %v767 = vpop.permute.xlu0 %766
        %vm768 = vcmask 785408
        %v769 = vsel %vm768, %v763, %v765
        %v770 = vsel %vm768, %v765, %v767
        %v772 = vsel %vm226, %v744, 0
        %v775 = vsel %vm230, %v769, 0
        %v778 = vsel %vm230, %v770, 0
        %780 = vmatprep.subr.bf16.mxu0 0
        %781 = vmatpush1.bf16.msra.mxu0 0
        %782 = vmatprep.subr.bf16.mxu0 0
        %783 = vmatpush1.bf16.msra.mxu0 0
        %784 = vmatprep.subr.bf16.mxu0 0
        %785 = vmatpush1.bf16.msra.mxu0 0
        %786 = vmatprep.subr.bf16.mxu0 0
        %787 = vmatpush1.bf16.msra.mxu0 0
        %788 = vmatprep.subr.bf16.mxu0 0
        %789 = vmatpush1.bf16.msra.mxu0 0
        %790 = vmatprep.subr.bf16.mxu0 0
        %791 = vmatpush1.bf16.msra.mxu0 0
        %792 = vmatprep.subr.bf16.mxu0 0
        %793 = vmatpush1.bf16.msra.mxu0 0
        %794 = vmatprep.subr.bf16.mxu0 %v778
        %795 = vmatpush1.bf16.msra.mxu0 %v775
        %796 = vmatprep.subr.bf16.mxu0 0
        %797 = vmatpush2.bf16.msra.mxu0 0
        %798 = vmatprep.subr.bf16.mxu0 0
        %799 = vmatpush2.bf16.msra.mxu0 0
        %800 = vmatprep.subr.bf16.mxu0 0
        %801 = vmatpush2.bf16.msra.mxu0 0
        %802 = vmatprep.subr.bf16.mxu0 0
        %803 = vmatpush2.bf16.msra.mxu0 0
        %804 = vmatprep.subr.bf16.mxu0 0
        %805 = vmatpush2.bf16.msra.mxu0 0
        %806 = vmatprep.subr.bf16.mxu0 0
        %807 = vmatpush2.bf16.msra.mxu0 0
        %808 = vmatprep.subr.bf16.mxu0 0
        %809 = vmatpush2.bf16.msra.mxu0 0
        %810 = vmatprep.subr.bf16.mxu0 0
        %811 = vmatpush2.bf16.msra.mxu0 0
        %812 = vmatprep.mubr.bf16.mxu0 0
        %813 = vmatmul.mubr.bf16.gmra.mxu0 %v772
        %v814 = vpop.f32.mrf.mxu0
        %v815 = vadd.f32 0.0, %v814
        %v816 = vpop.f32.mrf.mxu0
        %v817 = vadd.f32 0.0, %v816
        %v818 = vpop.f32.mrf.mxu0
        %v819 = vpop.f32.mrf.mxu0
        %820 = vdwg.mxu0
        %v821 = vmul.f32 %v815, %v283
        %v822 = vmul.f32 %v817, %v287
        %v823 = vadd.f32 %v736, %v821
        %v824 = vadd.f32 %v737, %v822
        %v825 = vld [vmem:[%s189] sm:$0x3f]
        %v826 = vld [vmem:[%s1] sm:$0xf]
        %v828 = vunpack.c.l.b16 %v826
        %v829 = vpack.c.b16 %v828, %v828
        %830 = vrot.lane.b32.xlu0 %v829, 100
        %v831 = vpop.permute.xlu0 %830
        %v833 = vcombine.high %v825, %v825
        %v835 = vunpack.c.l.s4 1983009808
        %v836 = vunpack.c.0.s8 %v835
        %v837 = vlaneseq
        %v838 = vshrl.u32 %v837, 7
        %v839 = vsub.s32 %v836, %v838
        %v840 = vrot.slane %v825, %v839
        %v842 = vunpack.c.l.s4 1983009808
        %v843 = vunpack.c.0.s8 %v842
        %v844 = vlaneseq
        %v845 = vshrl.u32 %v844, 7
        %v846 = vsub.s32 %v843, %v845
        %v847 = vrot.slane %v833, %v846
        %v848 = vcombine.high %v840, %v840
        %849 = vrot.lane.b32.xlu0 %v840, 95
        %v850 = vpop.permute.xlu0 %849
        %851 = vrot.lane.b32.xlu0 %v848, 95
        %v852 = vpop.permute.xlu0 %851
        %853 = vrot.lane.b32.xlu0 %v847, 95
        %v854 = vpop.permute.xlu0 %853
        %vm855 = vcmask 777216
        %v856 = vsel %vm855, %v850, %v852
        %v857 = vsel %vm855, %v852, %v854
        %v859 = vsel %vm226, %v831, 0
        %v862 = vsel %vm230, %v856, 0
        %v865 = vsel %vm230, %v857, 0
        %867 = vmatprep.subr.bf16.mxu0 0
        %868 = vmatpush1.bf16.msra.mxu0 0
        %869 = vmatprep.subr.bf16.mxu0 0
        %870 = vmatpush1.bf16.msra.mxu0 0
        %871 = vmatprep.subr.bf16.mxu0 0
        %872 = vmatpush1.bf16.msra.mxu0 0
        %873 = vmatprep.subr.bf16.mxu0 0
        %874 = vmatpush1.bf16.msra.mxu0 0
        %875 = vmatprep.subr.bf16.mxu0 0
        %876 = vmatpush1.bf16.msra.mxu0 0
        %877 = vmatprep.subr.bf16.mxu0 0
        %878 = vmatpush1.bf16.msra.mxu0 0
        %879 = vmatprep.subr.bf16.mxu0 0
        %880 = vmatpush1.bf16.msra.mxu0 0
        %881 = vmatprep.subr.bf16.mxu0 %v865
        %882 = vmatpush1.bf16.msra.mxu0 %v862
        %883 = vmatprep.subr.bf16.mxu0 0
        %884 = vmatpush2.bf16.msra.mxu0 0
        %885 = vmatprep.subr.bf16.mxu0 0
        %886 = vmatpush2.bf16.msra.mxu0 0
        %887 = vmatprep.subr.bf16.mxu0 0
        %888 = vmatpush2.bf16.msra.mxu0 0
        %889 = vmatprep.subr.bf16.mxu0 0
        %890 = vmatpush2.bf16.msra.mxu0 0
        %891 = vmatprep.subr.bf16.mxu0 0
        %892 = vmatpush2.bf16.msra.mxu0 0
        %893 = vmatprep.subr.bf16.mxu0 0
        %894 = vmatpush2.bf16.msra.mxu0 0
        %895 = vmatprep.subr.bf16.mxu0 0
        %896 = vmatpush2.bf16.msra.mxu0 0
        %897 = vmatprep.subr.bf16.mxu0 0
        %898 = vmatpush2.bf16.msra.mxu0 0
        %899 = vmatprep.mubr.bf16.mxu0 0
        %900 = vmatmul.mubr.bf16.gmra.mxu0 %v859
        %v901 = vpop.f32.mrf.mxu0
        %v902 = vadd.f32 0.0, %v901
        %v903 = vpop.f32.mrf.mxu0
        %v904 = vadd.f32 0.0, %v903
        %v905 = vpop.f32.mrf.mxu0
        %v906 = vpop.f32.mrf.mxu0
        %907 = vdwg.mxu0
        %v908 = vadd.f32 %v823, %v902
        %v909 = vadd.f32 %v824, %v904
        %v910 = vld [vmem:[%s189] sm:$0x3f]
        %v911 = vld [vmem:[%s1] sm:$0xf]
        %v913 = vunpack.c.l.b16 %v911
        %v914 = vpack.c.b16 %v913, %v913
        %915 = vrot.lane.b32.xlu0 %v914, 96
        %v916 = vpop.permute.xlu0 %915
        %v918 = vcombine.high %v910, %v910
        %v920 = vunpack.c.l.s4 1983009808
        %v921 = vunpack.c.0.s8 %v920
        %v922 = vlaneseq
        %v923 = vshrl.u32 %v922, 7
        %v924 = vsub.s32 %v921, %v923
        %v925 = vrot.slane %v910, %v924
        %v927 = vunpack.c.l.s4 1983009808
        %v928 = vunpack.c.0.s8 %v927
        %v929 = vlaneseq
        %v930 = vshrl.u32 %v929, 7
        %v931 = vsub.s32 %v928, %v930
        %v932 = vrot.slane %v918, %v931
        %v933 = vcombine.high %v925, %v925
        %934 = vrot.lane.b32.xlu0 %v925, 94
        %v935 = vpop.permute.xlu0 %934
        %936 = vrot.lane.b32.xlu0 %v933, 94
        %v937 = vpop.permute.xlu0 %936
        %938 = vrot.lane.b32.xlu0 %v932, 94
        %v939 = vpop.permute.xlu0 %938
        %vm940 = vcmask 769024
        %v941 = vsel %vm940, %v935, %v937
        %v942 = vsel %vm940, %v937, %v939
        %v944 = vsel %vm226, %v916, 0
        %v947 = vsel %vm230, %v941, 0
        %v950 = vsel %vm230, %v942, 0
        %952 = vmatprep.subr.bf16.mxu0 0
        %953 = vmatpush1.bf16.msra.mxu0 0
        %954 = vmatprep.subr.bf16.mxu0 0
        %955 = vmatpush1.bf16.msra.mxu0 0
        %956 = vmatprep.subr.bf16.mxu0 0
        %957 = vmatpush1.bf16.msra.mxu0 0
        %958 = vmatprep.subr.bf16.mxu0 0
        %959 = vmatpush1.bf16.msra.mxu0 0
        %960 = vmatprep.subr.bf16.mxu0 0
        %961 = vmatpush1.bf16.msra.mxu0 0
        %962 = vmatprep.subr.bf16.mxu0 0
        %963 = vmatpush1.bf16.msra.mxu0 0
        %964 = vmatprep.subr.bf16.mxu0 0
        %965 = vmatpush1.bf16.msra.mxu0 0
        %966 = vmatprep.subr.bf16.mxu0 %v950
        %967 = vmatpush1.bf16.msra.mxu0 %v947
        %968 = vmatprep.subr.bf16.mxu0 0
        %969 = vmatpush2.bf16.msra.mxu0 0
        %970 = vmatprep.subr.bf16.mxu0 0
        %971 = vmatpush2.bf16.msra.mxu0 0
        %972 = vmatprep.subr.bf16.mxu0 0
        %973 = vmatpush2.bf16.msra.mxu0 0
        %974 = vmatprep.subr.bf16.mxu0 0
        %975 = vmatpush2.bf16.msra.mxu0 0
        %976 = vmatprep.subr.bf16.mxu0 0
        %977 = vmatpush2.bf16.msra.mxu0 0
        %978 = vmatprep.subr.bf16.mxu0 0
        %979 = vmatpush2.bf16.msra.mxu0 0
        %980 = vmatprep.subr.bf16.mxu0 0
        %981 = vmatpush2.bf16.msra.mxu0 0
        %982 = vmatprep.subr.bf16.mxu0 0
        %983 = vmatpush2.bf16.msra.mxu0 0
        %984 = vmatprep.mubr.bf16.mxu0 0
        %985 = vmatmul.mubr.bf16.gmra.mxu0 %v944
        %v986 = vpop.f32.mrf.mxu0
        %v987 = vadd.f32 0.0, %v986
        %v988 = vpop.f32.mrf.mxu0
        %v989 = vadd.f32 0.0, %v988
        %v990 = vpop.f32.mrf.mxu0
        %v991 = vpop.f32.mrf.mxu0
        %992 = vdwg.mxu0
        %v993 = vmul.f32 %v987, %v468
        %v994 = vmul.f32 %v989, %v472
        %v995 = vadd.f32 %v908, %v993
        %v996 = vadd.f32 %v909, %v994
        %v997 = vld [vmem:[%s2] sm:$0xff]
        %999 = vset.pattern.permute.xlu0 0
        %1000 = vperm.xlu0 %999, %v997
        %v1001 = vpop.permute.xlu0 %1000
        %v1003 = vadd.f32 %v995, %v1001
        %v1004 = vadd.f32 %v996, %v1001
        %v1005 = vpack.c.bf16 %v1003, %v1003
        %v1006 = vpack.c.bf16 %v1004, %v1004
        %v1009 = vunpack.c.l.b16 %v1005
        %v1010 = vunpack.c.l.b16 %v1006
        %v1011 = vpack.c.b16 %v1010, %v1009
        %1013 = vst [vmem:[%s213] sm:$0xff] %v1011
        %s1014 = sand.u32 %s118, 1
        %s1015 = scalar_lea.sflag [#allocation4], %s1014
        %s1016 = sand.u32 %s118, 1
        %s1017 = smul.addr %s1016, 8
        %s1018 = scalar_lea.vmem [#allocation5], %s1017
        // Predicated region
        $region41: #{tpu_custom_call.1} parent=35 // pred_check
          %p1019 = pneg %p128
        $region42: #{tpu_custom_call.1} parent=35 // pred_check_branch
          %1021 = sbr.rel (%p1019) target = $region44
        $region43: #{tpu_custom_call.1} parent=35 // pred_region
          %s1023 = ssub.s32 128, 128
          %1024 = vsyncadd %s1015, %s1023
          %s1025 = smul.addr %s21, 2
          %s1026 = smul.addr %s1025, 64
          %s1027 = scalar_lea.hbm %s4, %s1026
          %s1029 = sshll.u32 %s1018, 4
          %s1030 = int_to_ptr.vmem [resolvable:$true] %s1029
          %1032 = dma.vmem_to_hbm [thread:$0]  %s1030, 128, %s1027, %s1015
        $region44: #{tpu_custom_call.1} parent=35 // pred_fallthru
          _
      $region36: #{tpu_custom_call.1} parent=5 // pred_fallthru
        _
      %p1033 = scmp.le.s32.totalorder 2, %s16
      // Predicated region
      $region45: #{tpu_custom_call.1} parent=5 // pred_check
        %p1034 = pneg %p1033
      $region46: #{tpu_custom_call.1} parent=5 // pred_check_branch
        %1036 = sbr.rel (%p1034) target = $region48
      $region47: #{tpu_custom_call.1} parent=5 // pred_region
        %s1037 = ssub.s32 %s16, 2
        // Predicated region
        $region49: #{tpu_custom_call.1} parent=47 // pred_check
          %p1038 = pneg %p134
        $region50: #{tpu_custom_call.1} parent=47 // pred_check_branch
          %1040 = sbr.rel (%p1038) target = $region52
        $region51: #{tpu_custom_call.1} parent=47 // pred_region
          %s1041 = sand.u32 %s119, 1
          %s1042 = scalar_lea.sflag [#allocation4], %s1041
          %s1043 = sand.u32 %s119, 1
          %s1044 = smul.addr %s1043, 8
          %s1045 = scalar_lea.vmem [#allocation5], %s1044
          %1046 = dma.done %s1042, 128
        $region52: #{tpu_custom_call.1} parent=47 // pred_fallthru
          _
      $region48: #{tpu_custom_call.1} parent=5 // pred_fallthru
        _
    $region6: #{tpu_custom_call.1} parent=1 // loop_footer
      %s20 = sadd.s32 1, %s16
    $region7: #{tpu_custom_call.1} parent=1 // loop_footer_branch
      %15 = sbr.rel target = $region3
    $region8: #{tpu_custom_call.1} parent=1 // loop_exit
      _
    %1047 = vsyncpa [#allocation3], 1
    %s1048 = scalar_lea.sflag [#allocation3], 1
    %1049 = vsyncpa %s1048, 1
    %1050 = vsyncpa [#allocation4], 1
    %s1051 = scalar_lea.sflag [#allocation4], 1
    %1052 = vsyncpa %s1051, 1

</llo_original>
